<compile_context>
chip_gen: v7x
topology: tpu7x:2x2x1
jax: 0.10.0
libtpu: 0.0.40
codegen_flags: <defaults>
</compile_context>

<pallas_src>
import jax
import jax.numpy as jnp
from jax.experimental import pallas as pl
from jax.experimental.pallas import tpu as pltpu

HIDDEN = 64     # hidden width of the torch module
HID_PAD = 128   # padded hidden width (lane-dense)
OUT_PAD = 128   # fused actor+critic head output width (lane-dense)


def _round_up(x, m):
    return (x + m - 1) // m * m


def ppo_actor_critic_kernel(x_ref, w1_ref, wstack_ref, b_ref, out_ref):
    """One batch tile of the full forward pass.

    x_ref:      (bt, S)             input states
    w1_ref:     (S, 128)            w1 zero-padded on the lane dim
    wstack_ref: (2, 128, 128)       [0] = w2 padded, [1] = [wa | wc | 0] padded
    b_ref:      (3, 128)            rows: b1, b2, [ba | bc | 0] (zero-padded)
    out_ref:    (bt, 128)           lanes [0:A) logits, lane A value, rest zero
    """
    x = x_ref[...]
    b = b_ref[...]

    # shared_fc1 + relu  (padded lanes stay exactly zero: 0*w + 0 bias)
    h = jnp.dot(x, w1_ref[...], preferred_element_type=jnp.float32) + b[0:1, :]
    h = jnp.maximum(h, 0.0)

    # shared_fc2 + relu  (zero lanes of h hit zero rows of w2p -> contribute 0)
    h = jnp.dot(h, wstack_ref[0], preferred_element_type=jnp.float32) + b[1:2, :]
    h = jnp.maximum(h, 0.0)

    # fused actor + critic head: one lane-dense (bt, 128) matmul + store
    out = jnp.dot(h, wstack_ref[1], preferred_element_type=jnp.float32) + b[2:3, :]
    out_ref[...] = out.astype(out_ref.dtype)


def pack_params(params):
    """Pack the 8 parameter arrays into 3 lane-dense operands."""
    w1, w2 = params["w1"], params["w2"]
    wa, wc = params["wa"], params["wc"]
    b1 = params["b1"].reshape(1, -1)
    b2 = params["b2"].reshape(1, -1)
    ba = params["ba"].reshape(1, -1)
    bc = params["bc"].reshape(1, -1)

    assert w1.shape[1] == HIDDEN and w2.shape == (HIDDEN, HIDDEN)
    action_size = wa.shape[1]
    assert action_size + 1 <= OUT_PAD, "action_size + 1 must fit in 128 lanes"

    # w1: (S, 64) -> (S, 128)
    w1p = jnp.pad(w1, ((0, 0), (0, HID_PAD - HIDDEN)))
    # w2: (64, 64) -> (128, 128)
    w2p = jnp.pad(w2, ((0, HID_PAD - HIDDEN), (0, HID_PAD - HIDDEN)))
    # heads: concat (64, A) and (64, 1) -> (64, A+1) -> (128, 128)
    wh = jnp.concatenate([wa, wc], axis=1)
    whp = jnp.pad(wh, ((0, HID_PAD - HIDDEN), (0, OUT_PAD - wh.shape[1])))
    wstack = jnp.stack([w2p, whp], axis=0)                      # (2, 128, 128)

    bh = jnp.concatenate([ba, bc], axis=1)                      # (1, A+1)
    bstack = jnp.concatenate(
        [
            jnp.pad(b1, ((0, 0), (0, HID_PAD - b1.shape[1]))),
            jnp.pad(b2, ((0, 0), (0, HID_PAD - b2.shape[1]))),
            jnp.pad(bh, ((0, 0), (0, OUT_PAD - bh.shape[1]))),
        ],
        axis=0,
    )                                                           # (3, 128)
    return w1p, wstack, bstack


def ppo_actor_critic_forward(state, params, *, batch_tile=512):
    """PPOActorCritic forward.

    state:  (B, state_size) float32
    params: dict w1,b1,w2,b2,wa,ba,wc,bc (layouts documented above)
    returns (action_logits (B, action_size), value (B, 1))
    """
    B, S = state.shape
    action_size = params["wa"].shape[1]

    w1p, wstack, bstack = pack_params(params)

    # Batch tiling: one grid point for small batches, pipelined "parallel"
    # grid (and both v7x TensorCores) for large rollout batches.
    bt = min(batch_tile, _round_up(B, 8))
    b_pad = _round_up(B, bt)
    x = jnp.pad(state, ((0, b_pad - B), (0, 0))) if b_pad != B else state
    grid = (b_pad // bt,)

    out = pl.pallas_call(
        ppo_actor_critic_kernel,
        out_shape=jax.ShapeDtypeStruct((b_pad, OUT_PAD), jnp.float32),
        grid=grid,
        in_specs=[
            pl.BlockSpec((bt, S), lambda i: (i, 0)),                 # x: tiled over batch
            pl.BlockSpec((S, HID_PAD), lambda i: (0, 0)),            # w1p: replicated
            pl.BlockSpec((2, HID_PAD, HID_PAD), lambda i: (0, 0, 0)),# w2 + heads
            pl.BlockSpec((3, OUT_PAD), lambda i: (0, 0)),            # biases
        ],
        out_specs=pl.BlockSpec((bt, OUT_PAD), lambda i: (i, 0)),
        compiler_params=pltpu.CompilerParams(
            dimension_semantics=("parallel",),
        ),
    )(x, w1p, wstack, bstack)

    logits = out[:B, :action_size]
    value = out[:B, action_size:action_size + 1]
    return logits, value


# ---------------------------------------------------------------------------
# Parameter init (matches the torch module) and pure-JAX reference.
# ---------------------------------------------------------------------------

def xavier_uniform(key, fan_in, fan_out, dtype=jnp.float32):
    """nn.init.xavier_uniform_ (gain=1), stored as [fan_in, fan_out]."""
    limit = jnp.sqrt(6.0 / (fan_in + fan_out))
    return jax.random.uniform(
        key, (fan_in, fan_out), dtype=dtype, minval=-limit, maxval=limit
    )


def init_params(key, state_size, action_size, hidden=HIDDEN):
    k1, k2, k3, k4 = jax.random.split(key, 4)
    return {
        "w1": xavier_uniform(k1, state_size, hidden),
        "b1": jnp.zeros((1, hidden), jnp.float32),
        "w2": xavier_uniform(k2, hidden, hidden),
        "b2": jnp.zeros((1, hidden), jnp.float32),
        "wa": xavier_uniform(k3, hidden, action_size),
        "ba": jnp.zeros((1, action_size), jnp.float32),
        "wc": xavier_uniform(k4, hidden, 1),
        "bc": jnp.zeros((1, 1), jnp.float32),
    }


def reference_forward(state, params):
    h1 = jnp.maximum(state @ params["w1"] + params["b1"], 0.0)
    h2 = jnp.maximum(h1 @ params["w2"] + params["b2"], 0.0)
    logits = h2 @ params["wa"] + params["ba"]
    value = h2 @ params["wc"] + params["bc"]
    return logits, value


if __name__ == "__main__":
    key = jax.random.PRNGKey(0)
    k_params, k_state, k_big = jax.random.split(key, 3)

    batch = 8
    state_size = 8
    action_size = 4

    params = init_params(k_params, state_size, action_size)

    # --- small batch: single grid point ---
    state = jax.random.normal(k_state, (batch, state_size), dtype=jnp.float32)
    logits, value = jax.block_until_ready(ppo_actor_critic_forward(state, params))
    ref_logits, ref_value = reference_forward(state, params)
    assert logits.shape == (batch, action_size)
    assert value.shape == (batch, 1)
    assert jnp.allclose(logits, ref_logits, atol=1e-5, rtol=1e-5)
    assert jnp.allclose(value, ref_value, atol=1e-5, rtol=1e-5)

    # --- larger, non-divisible batch: exercises the tiled "parallel" grid ---
    big_batch = 300
    big_state = jax.random.normal(k_big, (big_batch, state_size), dtype=jnp.float32)
    blogits, bvalue = jax.block_until_ready(
        ppo_actor_critic_forward(big_state, params, batch_tile=128)
    )
    bref_logits, bref_value = reference_forward(big_state, params)
    assert blogits.shape == (big_batch, action_size)
    assert bvalue.shape == (big_batch, 1)
    assert jnp.allclose(blogits, bref_logits, atol=1e-5, rtol=1e-5)
    assert jnp.allclose(bvalue, bref_value, atol=1e-5, rtol=1e-5)

    print("KERNEL_OK")
</pallas_src>

<mosaic_0001>
module attributes {stable_mosaic.version = 11 : i64} {
  func.func @ppo_actor_critic_kernel(%arg0: i32, %arg1: memref<8x8xf32, #tpu.memory_space<vmem>>, %arg2: memref<8x128xf32, #tpu.memory_space<vmem>>, %arg3: memref<2x128x128xf32, #tpu.memory_space<vmem>>, %arg4: memref<3x128xf32, #tpu.memory_space<vmem>>, %arg5: memref<8x128xf32, #tpu.memory_space<vmem>>) attributes {dimension_semantics = [#tpu.dimension_semantics<parallel>], iteration_bounds = array<i64: 1>, scalar_prefetch = 0 : i64, scratch_operands = 0 : i64, tpu.core_type = #tpu.core_type<tc>, window_params = [{transform_indices = @transform_0, window_bounds = array<i64: 8, 8>}, {pipeline_mode = #tpu.pipeline_mode<synchronous>, transform_indices = @transform_1, window_bounds = array<i64: 8, 128>}, {pipeline_mode = #tpu.pipeline_mode<synchronous>, transform_indices = @transform_2, window_bounds = array<i64: 2, 128, 128>}, {pipeline_mode = #tpu.pipeline_mode<synchronous>, transform_indices = @transform_3, window_bounds = array<i64: 3, 128>}, {transform_indices = @transform_4, window_bounds = array<i64: 8, 128>}]} {
    %c0 = arith.constant 0 : index
    %c0_0 = arith.constant 0 : index
    %0 = vector.load %arg1[%c0, %c0_0] : memref<8x8xf32, #tpu.memory_space<vmem>>, vector<8x8xf32>
    %c0_1 = arith.constant 0 : index
    %c0_2 = arith.constant 0 : index
    %1 = vector.load %arg4[%c0_1, %c0_2] : memref<3x128xf32, #tpu.memory_space<vmem>>, vector<3x128xf32>
    %c0_3 = arith.constant 0 : index
    %c0_4 = arith.constant 0 : index
    %2 = vector.load %arg2[%c0_3, %c0_4] : memref<8x128xf32, #tpu.memory_space<vmem>>, vector<8x128xf32>
    %cst = arith.constant dense<0.000000e+00> : vector<8x128xf32>
    %3 = tpu.matmul %0, %2, %cst {dimension_numbers = #tpu.dot_dimension_numbers<[1], [0], [0], [1], [0, 0, 1, 1], [], []>} : vector<8x8xf32>, vector<8x128xf32>, vector<8x128xf32> -> vector<8x128xf32>
    %4 = vector.extract_strided_slice %1 {offsets = [0, 0], sizes = [1, 128], strides = [1, 1]} : vector<3x128xf32> to vector<1x128xf32>
    %5 = vector.broadcast %4 : vector<1x128xf32> to vector<8x128xf32>
    %6 = arith.addf %3, %5 : vector<8x128xf32>
    %cst_5 = arith.constant 0.000000e+00 : f32
    %7 = vector.broadcast %cst_5 : f32 to vector<8x128xf32>
    %8 = arith.maximumf %6, %7 : vector<8x128xf32>
    %c0_6 = arith.constant 0 : index
    %c0_7 = arith.constant 0 : index
    %c0_8 = arith.constant 0 : index
    %9 = vector.load %arg3[%c0_6, %c0_7, %c0_8] : memref<2x128x128xf32, #tpu.memory_space<vmem>>, vector<1x128x128xf32>
    %10 = vector.shape_cast %9 : vector<1x128x128xf32> to vector<128x128xf32>
    %cst_9 = arith.constant dense<0.000000e+00> : vector<8x128xf32>
    %11 = tpu.matmul %8, %10, %cst_9 {dimension_numbers = #tpu.dot_dimension_numbers<[1], [0], [0], [1], [0, 0, 1, 1], [], []>} : vector<8x128xf32>, vector<128x128xf32>, vector<8x128xf32> -> vector<8x128xf32>
    %12 = vector.extract_strided_slice %1 {offsets = [1, 0], sizes = [1, 128], strides = [1, 1]} : vector<3x128xf32> to vector<1x128xf32>
    %13 = vector.broadcast %12 : vector<1x128xf32> to vector<8x128xf32>
    %14 = arith.addf %11, %13 : vector<8x128xf32>
    %cst_10 = arith.constant 0.000000e+00 : f32
    %15 = vector.broadcast %cst_10 : f32 to vector<8x128xf32>
    %16 = arith.maximumf %14, %15 : vector<8x128xf32>
    %c1 = arith.constant 1 : index
    %c0_11 = arith.constant 0 : index
    %c0_12 = arith.constant 0 : index
    %17 = vector.load %arg3[%c1, %c0_11, %c0_12] : memref<2x128x128xf32, #tpu.memory_space<vmem>>, vector<1x128x128xf32>
    %18 = vector.shape_cast %17 : vector<1x128x128xf32> to vector<128x128xf32>
    %cst_13 = arith.constant dense<0.000000e+00> : vector<8x128xf32>
    %19 = tpu.matmul %16, %18, %cst_13 {dimension_numbers = #tpu.dot_dimension_numbers<[1], [0], [0], [1], [0, 0, 1, 1], [], []>} : vector<8x128xf32>, vector<128x128xf32>, vector<8x128xf32> -> vector<8x128xf32>
    %20 = vector.extract_strided_slice %1 {offsets = [2, 0], sizes = [1, 128], strides = [1, 1]} : vector<3x128xf32> to vector<1x128xf32>
    %21 = vector.broadcast %20 : vector<1x128xf32> to vector<8x128xf32>
    %22 = arith.addf %19, %21 : vector<8x128xf32>
    %c0_14 = arith.constant 0 : index
    %c0_15 = arith.constant 0 : index
    %23 = vector.load %arg5[%c0_14, %c0_15] : memref<8x128xf32, #tpu.memory_space<vmem>>, vector<8x128xf32>
    tpu.vector_store %arg5[%c0_14, %c0_15], %22 {strides = array<i32>} : memref<8x128xf32, #tpu.memory_space<vmem>>, vector<8x128xf32>,
    return
  }
  func.func @transform_0(%arg0: i32) -> (i32, i32) {
    %c0_i32 = arith.constant 0 : i32
    %c0_i32_0 = arith.constant 0 : i32
    return %arg0, %c0_i32 : i32, i32
  }
  func.func @transform_1(%arg0: i32) -> (i32, i32) {
    %c0_i32 = arith.constant 0 : i32
    %c0_i32_0 = arith.constant 0 : i32
    %c0_i32_1 = arith.constant 0 : i32
    return %c0_i32, %c0_i32_0 : i32, i32
  }
  func.func @transform_2(%arg0: i32) -> (i32, i32, i32) {
    %c0_i32 = arith.constant 0 : i32
    %c0_i32_0 = arith.constant 0 : i32
    %c0_i32_1 = arith.constant 0 : i32
    %c0_i32_2 = arith.constant 0 : i32
    return %c0_i32, %c0_i32_0, %c0_i32_1 : i32, i32, i32
  }
  func.func @transform_3(%arg0: i32) -> (i32, i32) {
    %c0_i32 = arith.constant 0 : i32
    %c0_i32_0 = arith.constant 0 : i32
    %c0_i32_1 = arith.constant 0 : i32
    return %c0_i32, %c0_i32_0 : i32, i32
  }
  func.func @transform_4(%arg0: i32) -> (i32, i32) {
    %c0_i32 = arith.constant 0 : i32
    %c0_i32_0 = arith.constant 0 : i32
    return %arg0, %c0_i32 : i32, i32
  }
}

</mosaic_0001>

<llo_original>
// kernel: tpu_custom_call.1
$region0: #{tpu_custom_call.1}
  #allocation0 [shape = 'u32[]', space=smem, size = 0x4, offset = 0x4, fixed_abs, tag = 'smem constant byte address 0x4 - core index']
  #allocation1 [shape = 'u32[144,128]{1,0:T(1,128)}', space=vmem, size = 0x12000, scoped, tag = 'internal scratch']
  %s0 = inlined_call_operand.hbm [shape: f32[8,8], index: 0, kind: input, shape index: {}]
  %s1 = inlined_call_operand.hbm [shape: f32[8,128], index: 1, kind: input, shape index: {}]
  %s2 = inlined_call_operand.hbm [shape: f32[2,128,128], index: 2, kind: input, shape index: {}]
  %s3 = inlined_call_operand.vmem [shape: f32[3,128], index: 3, kind: input, shape index: {}]
  %s4 = inlined_call_operand.hbm [shape: f32[8,128], index: 4, kind: output, shape index: {}]
  %s5 = sld [smem:[#allocation0]]
  $region38: #{tpu_custom_call.1} parent=0
    _
  %s7 = ssub.s32 1, %s5
  %s8 = scalar_select 0, %s7, %s5
  $region1: #{tpu_custom_call.1} parent=0
    #allocation2 [shape = 'u8[4096]{0}', space=vmem, size = 0x1000, scoped, tag = 'input window, operand 0, single buffered']
    #allocation3 [shape = 's32[1]{0}', space=sflag, size = 0x4, scoped, tag = 'scoped memory for tpu_custom_call.1']
    #allocation4 [shape = 's32[1]{0}', space=sflag, size = 0x4, scoped, tag = 'scoped memory for tpu_custom_call.1']
    #allocation5 [shape = 'u8[4096]{0}', space=vmem, size = 0x1000, scoped, tag = 'input window, operand 1, single buffered']
    #allocation6 [shape = 's32[1]{0}', space=sflag, size = 0x4, scoped, tag = 'scoped memory for tpu_custom_call.1']
    #allocation7 [shape = 'u8[131072]{0}', space=vmem, size = 0x20000, scoped, tag = 'input window, operand 2, single buffered']
    #allocation8 [shape = 'u8[4096]{0}', space=vmem, size = 0x1000, scoped, tag = 'output window, operand 0, single buffered']
    %9 = vsyncpa [#allocation3], 0
    %10 = vsyncpa [#allocation6], 0
    %11 = vsyncpa [#allocation4], 0
    // Predicated region
    $region2: #{tpu_custom_call.1} parent=1 // pred_check
      _
    $region3: #{tpu_custom_call.1} parent=1 // pred_check_branch
      %13 = sbr.rel (0) target = $region5
    $region4: #{tpu_custom_call.1} parent=1 // pred_region
      %s15 = ssub.s32 128, 128
      %16 = vsyncadd [#allocation3], %s15
      %s18 = sshll.u32 [#allocation2], 4
      %s19 = int_to_ptr.vmem [resolvable:$true] %s18
      %21 = dma.hbm_to_vmem [thread:$0]  %s0, 128, %s19, [#allocation3]
    $region5: #{tpu_custom_call.1} parent=1 // pred_fallthru
      _
    // Predicated region
    $region6: #{tpu_custom_call.1} parent=1 // pred_check
      _
    $region7: #{tpu_custom_call.1} parent=1 // pred_check_branch
      %23 = sbr.rel (0) target = $region9
    $region8: #{tpu_custom_call.1} parent=1 // pred_region
      %s25 = ssub.s32 128, 128
      %26 = vsyncadd [#allocation6], %s25
      %s28 = sshll.u32 [#allocation5], 4
      %s29 = int_to_ptr.vmem [resolvable:$true] %s28
      %31 = dma.hbm_to_vmem [thread:$0]  %s1, 128, %s29, [#allocation6]
    $region9: #{tpu_custom_call.1} parent=1 // pred_fallthru
      _
    // Predicated region
    $region10: #{tpu_custom_call.1} parent=1 // pred_check
      _
    $region11: #{tpu_custom_call.1} parent=1 // pred_check_branch
      %33 = sbr.rel (0) target = $region13
    $region12: #{tpu_custom_call.1} parent=1 // pred_region
      %s35 = ssub.s32 4096, 4096
      %36 = vsyncadd [#allocation6], %s35
      %s37 = sshll.u32 [#allocation7], 4
      %s38 = int_to_ptr.vmem [resolvable:$true] %s37
      %43 = dma.hbm_to_vmem [thread:$0]  %s2, 4096, %s38, [#allocation6], 128, 128, 8
    $region13: #{tpu_custom_call.1} parent=1 // pred_fallthru
      _
    // Predicated region
    $region14: #{tpu_custom_call.1} parent=1 // pred_check
      _
    $region15: #{tpu_custom_call.1} parent=1 // pred_check_branch
      %45 = sbr.rel (0) target = $region17
    $region16: #{tpu_custom_call.1} parent=1 // pred_region
      _
    $region17: #{tpu_custom_call.1} parent=1 // pred_fallthru
      _
    // Predicated region
    $region18: #{tpu_custom_call.1} parent=1 // pred_check
      _
    $region19: #{tpu_custom_call.1} parent=1 // pred_check_branch
      %47 = sbr.rel (0) target = $region21
    $region20: #{tpu_custom_call.1} parent=1 // pred_region
      %48 = dma.done [#allocation3], 128
    $region21: #{tpu_custom_call.1} parent=1 // pred_fallthru
      _
    // Predicated region
    $region22: #{tpu_custom_call.1} parent=1 // pred_check
      _
    $region23: #{tpu_custom_call.1} parent=1 // pred_check_branch
      %50 = sbr.rel (0) target = $region25
    $region24: #{tpu_custom_call.1} parent=1 // pred_region
      %51 = dma.done [#allocation6], 128
    $region25: #{tpu_custom_call.1} parent=1 // pred_fallthru
      _
    // Predicated region
    $region26: #{tpu_custom_call.1} parent=1 // pred_check
      _
    $region27: #{tpu_custom_call.1} parent=1 // pred_check_branch
      %53 = sbr.rel (0) target = $region29
    $region28: #{tpu_custom_call.1} parent=1 // pred_region
      %54 = dma.done [#allocation6], 4096
    $region29: #{tpu_custom_call.1} parent=1 // pred_fallthru
      _
    %v55 = vld [vmem:[#allocation2] sm:$0xff]
    %v56 = vld [vmem:[%s3] sm:$0x7]
    %v57 = vld [vmem:[#allocation5] sm:$0xff]
    %v58 = vlaneseq
    %v59 = vshrl.u32 %v58, 7
    %v60 = vsub.s32 0, %v59
    %v61 = vrot.slane %v56, %v60
    %vm62 = vcmask 64512
    %v64 = vsel %vm62, %v55, 0
    %66 = vmatprep.subr.mxu0 0.0
    %67 = vmatpush1.msra.mxu0 %v57
    %68 = vmatprep.subr.mxu0 0.0
    %69 = vmatpush1.msra.mxu0 0.0
    %70 = vmatprep.subr.mxu0 0.0
    %71 = vmatpush1.msra.mxu0 0.0
    %72 = vmatprep.subr.mxu0 0.0
    %73 = vmatpush1.msra.mxu0 0.0
    %74 = vmatprep.subr.mxu0 0.0
    %75 = vmatpush1.msra.mxu0 0.0
    %76 = vmatprep.subr.mxu0 0.0
    %77 = vmatpush1.msra.mxu0 0.0
    %78 = vmatprep.subr.mxu0 0.0
    %79 = vmatpush1.msra.mxu0 0.0
    %80 = vmatprep.subr.mxu0 0.0
    %81 = vmatpush1.msra.mxu0 0.0
    %82 = vmatprep.subr.mxu0 0.0
    %83 = vmatpush1.msra.mxu0 0.0
    %84 = vmatprep.subr.mxu0 0.0
    %85 = vmatpush1.msra.mxu0 0.0
    %86 = vmatprep.subr.mxu0 0.0
    %87 = vmatpush1.msra.mxu0 0.0
    %88 = vmatprep.subr.mxu0 0.0
    %89 = vmatpush1.msra.mxu0 0.0
    %90 = vmatprep.subr.mxu0 0.0
    %91 = vmatpush1.msra.mxu0 0.0
    %92 = vmatprep.subr.mxu0 0.0
    %93 = vmatpush1.msra.mxu0 0.0
    %94 = vmatprep.subr.mxu0 0.0
    %95 = vmatpush1.msra.mxu0 0.0
    %96 = vmatprep.subr.mxu0 0.0
    %97 = vmatpush1.msra.mxu0 0.0
    %98 = vmatprep.subr.mxu0 0.0
    %99 = vmatpush1.msra.mxu0 0.0
    %100 = vmatprep.subr.mxu0 0.0
    %101 = vmatpush1.msra.mxu0 0.0
    %102 = vmatprep.subr.mxu0 0.0
    %103 = vmatpush1.msra.mxu0 0.0
    %104 = vmatprep.subr.mxu0 0.0
    %105 = vmatpush1.msra.mxu0 0.0
    %106 = vmatprep.subr.mxu0 0.0
    %107 = vmatpush1.msra.mxu0 0.0
    %108 = vmatprep.subr.mxu0 0.0
    %109 = vmatpush1.msra.mxu0 0.0
    %110 = vmatprep.subr.mxu0 0.0
    %111 = vmatpush1.msra.mxu0 0.0
    %112 = vmatprep.subr.mxu0 0.0
    %113 = vmatpush1.msra.mxu0 0.0
    %114 = vmatprep.subr.mxu0 0.0
    %115 = vmatpush1.msra.mxu0 0.0
    %116 = vmatprep.subr.mxu0 0.0
    %117 = vmatpush1.msra.mxu0 0.0
    %118 = vmatprep.subr.mxu0 0.0
    %119 = vmatpush1.msra.mxu0 0.0
    %120 = vmatprep.subr.mxu0 0.0
    %121 = vmatpush1.msra.mxu0 0.0
    %122 = vmatprep.subr.mxu0 0.0
    %123 = vmatpush1.msra.mxu0 0.0
    %124 = vmatprep.subr.mxu0 0.0
    %125 = vmatpush1.msra.mxu0 0.0
    %126 = vmatprep.subr.mxu0 0.0
    %127 = vmatpush1.msra.mxu0 0.0
    %128 = vmatprep.subr.mxu0 0.0
    %129 = vmatpush1.msra.mxu0 0.0
    %130 = vmatprep.mubr.f32.mxu0 0.0
    %131 = vmatmul.mubr.f32.gmra.mrb[0].mxu0 %v64
    %v132 = vpop.f32.mrb[0].mxu0
    %v133 = vadd.f32 %v61, %v132
    %v134 = vpop.f32.mrb[0].mxu0
    %135 = vdwg.mxu0
    %v136 = vmax.f32 %v133, 0.0
    %v137 = vld [vmem:[#allocation7] sm:$0xff]
    %v138 = vld [vmem:[#allocation7 + $0x8] sm:$0xff]
    %v139 = vld [vmem:[#allocation7 + $0x10] sm:$0xff]
    %v140 = vld [vmem:[#allocation7 + $0x18] sm:$0xff]
    %v141 = vld [vmem:[#allocation7 + $0x20] sm:$0xff]
    %v142 = vld [vmem:[#allocation7 + $0x28] sm:$0xff]
    %v143 = vld [vmem:[#allocation7 + $0x30] sm:$0xff]
    %v144 = vld [vmem:[#allocation7 + $0x38] sm:$0xff]
    %v145 = vld [vmem:[#allocation7 + $0x40] sm:$0xff]
    %v146 = vld [vmem:[#allocation7 + $0x48] sm:$0xff]
    %v147 = vld [vmem:[#allocation7 + $0x50] sm:$0xff]
    %v148 = vld [vmem:[#allocation7 + $0x58] sm:$0xff]
    %v149 = vld [vmem:[#allocation7 + $0x60] sm:$0xff]
    %v150 = vld [vmem:[#allocation7 + $0x68] sm:$0xff]
    %v151 = vld [vmem:[#allocation7 + $0x70] sm:$0xff]
    %v152 = vld [vmem:[#allocation7 + $0x78] sm:$0xff]
    %v153 = vlaneseq
    %v154 = vshrl.u32 %v153, 7
    %v155 = vsub.s32 1, %v154
    %v156 = vrot.slane %v56, %v155
    %157 = vmatprep.subr.mxu0 0.0
    %158 = vmatpush1.msra.mxu0 %v137
    %159 = vmatprep.subr.mxu0 0.0
    %160 = vmatpush1.msra.mxu0 %v138
    %161 = vmatprep.subr.mxu0 0.0
    %162 = vmatpush1.msra.mxu0 %v139
    %163 = vmatprep.subr.mxu0 0.0
    %164 = vmatpush1.msra.mxu0 %v140
    %165 = vmatprep.subr.mxu0 0.0
    %166 = vmatpush1.msra.mxu0 %v141
    %167 = vmatprep.subr.mxu0 0.0
    %168 = vmatpush1.msra.mxu0 %v142
    %169 = vmatprep.subr.mxu0 0.0
    %170 = vmatpush1.msra.mxu0 %v143
    %171 = vmatprep.subr.mxu0 0.0
    %172 = vmatpush1.msra.mxu0 %v144
    %173 = vmatprep.subr.mxu0 0.0
    %174 = vmatpush1.msra.mxu0 %v145
    %175 = vmatprep.subr.mxu0 0.0
    %176 = vmatpush1.msra.mxu0 %v146
    %177 = vmatprep.subr.mxu0 0.0
    %178 = vmatpush1.msra.mxu0 %v147
    %179 = vmatprep.subr.mxu0 0.0
    %180 = vmatpush1.msra.mxu0 %v148
    %181 = vmatprep.subr.mxu0 0.0
    %182 = vmatpush1.msra.mxu0 %v149
    %183 = vmatprep.subr.mxu0 0.0
    %184 = vmatpush1.msra.mxu0 %v150
    %185 = vmatprep.subr.mxu0 0.0
    %186 = vmatpush1.msra.mxu0 %v151
    %187 = vmatprep.subr.mxu0 0.0
    %188 = vmatpush1.msra.mxu0 %v152
    %189 = vmatprep.subr.mxu0 0.0
    %190 = vmatpush1.msra.mxu0 0.0
    %191 = vmatprep.subr.mxu0 0.0
    %192 = vmatpush1.msra.mxu0 0.0
    %193 = vmatprep.subr.mxu0 0.0
    %194 = vmatpush1.msra.mxu0 0.0
    %195 = vmatprep.subr.mxu0 0.0
    %196 = vmatpush1.msra.mxu0 0.0
    %197 = vmatprep.subr.mxu0 0.0
    %198 = vmatpush1.msra.mxu0 0.0
    %199 = vmatprep.subr.mxu0 0.0
    %200 = vmatpush1.msra.mxu0 0.0
    %201 = vmatprep.subr.mxu0 0.0
    %202 = vmatpush1.msra.mxu0 0.0
    %203 = vmatprep.subr.mxu0 0.0
    %204 = vmatpush1.msra.mxu0 0.0
    %205 = vmatprep.subr.mxu0 0.0
    %206 = vmatpush1.msra.mxu0 0.0
    %207 = vmatprep.subr.mxu0 0.0
    %208 = vmatpush1.msra.mxu0 0.0
    %209 = vmatprep.subr.mxu0 0.0
    %210 = vmatpush1.msra.mxu0 0.0
    %211 = vmatprep.subr.mxu0 0.0
    %212 = vmatpush1.msra.mxu0 0.0
    %213 = vmatprep.subr.mxu0 0.0
    %214 = vmatpush1.msra.mxu0 0.0
    %215 = vmatprep.subr.mxu0 0.0
    %216 = vmatpush1.msra.mxu0 0.0
    %217 = vmatprep.subr.mxu0 0.0
    %218 = vmatpush1.msra.mxu0 0.0
    %219 = vmatprep.subr.mxu0 0.0
    %220 = vmatpush1.msra.mxu0 0.0
    %221 = vmatprep.mubr.f32.mxu0 0.0
    %222 = vmatmul.mubr.f32.gmra.mrb[0].mxu0 %v136
    %v223 = vpop.f32.mrb[0].mxu0
    %v224 = vadd.f32 %v156, %v223
    %v225 = vpop.f32.mrb[0].mxu0
    %226 = vdwg.mxu0
    %v227 = vmax.f32 %v224, 0.0
    %s228 = scalar_lea.vmem [#allocation7], 128
    %v229 = vld [vmem:[%s228] sm:$0xff]
    %v230 = vld [vmem:[%s228 + $0x8] sm:$0xff]
    %v231 = vld [vmem:[%s228 + $0x10] sm:$0xff]
    %v232 = vld [vmem:[%s228 + $0x18] sm:$0xff]
    %v233 = vld [vmem:[%s228 + $0x20] sm:$0xff]
    %v234 = vld [vmem:[%s228 + $0x28] sm:$0xff]
    %v235 = vld [vmem:[%s228 + $0x30] sm:$0xff]
    %v236 = vld [vmem:[%s228 + $0x38] sm:$0xff]
    %v237 = vld [vmem:[%s228 + $0x40] sm:$0xff]
    %v238 = vld [vmem:[%s228 + $0x48] sm:$0xff]
    %v239 = vld [vmem:[%s228 + $0x50] sm:$0xff]
    %v240 = vld [vmem:[%s228 + $0x58] sm:$0xff]
    %v241 = vld [vmem:[%s228 + $0x60] sm:$0xff]
    %v242 = vld [vmem:[%s228 + $0x68] sm:$0xff]
    %v243 = vld [vmem:[%s228 + $0x70] sm:$0xff]
    %v244 = vld [vmem:[%s228 + $0x78] sm:$0xff]
    %v245 = vlaneseq
    %v246 = vshrl.u32 %v245, 7
    %v247 = vsub.s32 2, %v246
    %v248 = vrot.slane %v56, %v247
    %249 = vmatprep.subr.mxu0 0.0
    %250 = vmatpush1.msra.mxu0 %v229
    %251 = vmatprep.subr.mxu0 0.0
    %252 = vmatpush1.msra.mxu0 %v230
    %253 = vmatprep.subr.mxu0 0.0
    %254 = vmatpush1.msra.mxu0 %v231
    %255 = vmatprep.subr.mxu0 0.0
    %256 = vmatpush1.msra.mxu0 %v232
    %257 = vmatprep.subr.mxu0 0.0
    %258 = vmatpush1.msra.mxu0 %v233
    %259 = vmatprep.subr.mxu0 0.0
    %260 = vmatpush1.msra.mxu0 %v234
    %261 = vmatprep.subr.mxu0 0.0
    %262 = vmatpush1.msra.mxu0 %v235
    %263 = vmatprep.subr.mxu0 0.0
    %264 = vmatpush1.msra.mxu0 %v236
    %265 = vmatprep.subr.mxu0 0.0
    %266 = vmatpush1.msra.mxu0 %v237
    %267 = vmatprep.subr.mxu0 0.0
    %268 = vmatpush1.msra.mxu0 %v238
    %269 = vmatprep.subr.mxu0 0.0
    %270 = vmatpush1.msra.mxu0 %v239
    %271 = vmatprep.subr.mxu0 0.0
    %272 = vmatpush1.msra.mxu0 %v240
    %273 = vmatprep.subr.mxu0 0.0
    %274 = vmatpush1.msra.mxu0 %v241
    %275 = vmatprep.subr.mxu0 0.0
    %276 = vmatpush1.msra.mxu0 %v242
    %277 = vmatprep.subr.mxu0 0.0
    %278 = vmatpush1.msra.mxu0 %v243
    %279 = vmatprep.subr.mxu0 0.0
    %280 = vmatpush1.msra.mxu0 %v244
    %281 = vmatprep.subr.mxu0 0.0
    %282 = vmatpush1.msra.mxu0 0.0
    %283 = vmatprep.subr.mxu0 0.0
    %284 = vmatpush1.msra.mxu0 0.0
    %285 = vmatprep.subr.mxu0 0.0
    %286 = vmatpush1.msra.mxu0 0.0
    %287 = vmatprep.subr.mxu0 0.0
    %288 = vmatpush1.msra.mxu0 0.0
    %289 = vmatprep.subr.mxu0 0.0
    %290 = vmatpush1.msra.mxu0 0.0
    %291 = vmatprep.subr.mxu0 0.0
    %292 = vmatpush1.msra.mxu0 0.0
    %293 = vmatprep.subr.mxu0 0.0
    %294 = vmatpush1.msra.mxu0 0.0
    %295 = vmatprep.subr.mxu0 0.0
    %296 = vmatpush1.msra.mxu0 0.0
    %297 = vmatprep.subr.mxu0 0.0
    %298 = vmatpush1.msra.mxu0 0.0
    %299 = vmatprep.subr.mxu0 0.0
    %300 = vmatpush1.msra.mxu0 0.0
    %301 = vmatprep.subr.mxu0 0.0
    %302 = vmatpush1.msra.mxu0 0.0
    %303 = vmatprep.subr.mxu0 0.0
    %304 = vmatpush1.msra.mxu0 0.0
    %305 = vmatprep.subr.mxu0 0.0
    %306 = vmatpush1.msra.mxu0 0.0
    %307 = vmatprep.subr.mxu0 0.0
    %308 = vmatpush1.msra.mxu0 0.0
    %309 = vmatprep.subr.mxu0 0.0
    %310 = vmatpush1.msra.mxu0 0.0
    %311 = vmatprep.subr.mxu0 0.0
    %312 = vmatpush1.msra.mxu0 0.0
    %313 = vmatprep.mubr.f32.mxu0 0.0
    %314 = vmatmul.mubr.f32.gmra.mrb[0].mxu0 %v227
    %v315 = vpop.f32.mrb[0].mxu0
    %v316 = vadd.f32 %v248, %v315
    %v317 = vpop.f32.mrb[0].mxu0
    %318 = vdwg.mxu0
    %319 = vst [vmem:[#allocation8] sm:$0xff] %v316
    // Predicated region
    $region30: #{tpu_custom_call.1} parent=1 // pred_check
      _
    $region31: #{tpu_custom_call.1} parent=1 // pred_check_branch
      %321 = sbr.rel (0) target = $region33
    $region32: #{tpu_custom_call.1} parent=1 // pred_region
      %s323 = ssub.s32 128, 128
      %324 = vsyncadd [#allocation4], %s323
      %s326 = sshll.u32 [#allocation8], 4
      %s327 = int_to_ptr.vmem [resolvable:$true] %s326
      %329 = dma.vmem_to_hbm [thread:$0]  %s327, 128, %s4, [#allocation4]
    $region33: #{tpu_custom_call.1} parent=1 // pred_fallthru
      _
    // Predicated region
    $region34: #{tpu_custom_call.1} parent=1 // pred_check
      _
    $region35: #{tpu_custom_call.1} parent=1 // pred_check_branch
      %331 = sbr.rel (0) target = $region37
    $region36: #{tpu_custom_call.1} parent=1 // pred_region
      %332 = dma.done [#allocation4], 128
    $region37: #{tpu_custom_call.1} parent=1 // pred_fallthru
      _
    %333 = vsyncpa [#allocation3], 1
    %334 = vsyncpa [#allocation6], 1
    %335 = vsyncpa [#allocation4], 1

</llo_original>
